<compile_context>
chip_gen: v6e
topology: v6e:2x2x1
jax: 0.10.0
libtpu: 0.0.40
codegen_flags: <defaults>
</compile_context>

<pallas_src>
import math

import jax
import jax.numpy as jnp
from jax.experimental import pallas as pl
from jax.experimental.pallas import tpu as pltpu

_HALF_PI = math.pi / 2.0
# Per-step double-buffered (input + output) VMEM budget. Kept well under the
# v5e scoped default (16 MiB); v6e/v7x have 32 MiB scoped so this is safe there too.
_VMEM_BUDGET = 10 * 1024 * 1024


def _round_up(x, m):
    return ((x + m - 1) // m) * m


def _choose_tiles(n_rows, row_cap):
    """Balanced tiling: (rows_per_tile (mult of 8), num_tiles)."""
    want = pl.cdiv(n_rows, row_cap)
    # Aim for >= 2 grid steps whenever possible so the "parallel" grid axis can
    # span both TensorCores on v7x; the extra grid step is ~0.35 us on v5e/v6e.
    if n_rows > 8:
        want = max(want, 2)
    tile = min(row_cap, _round_up(pl.cdiv(n_rows, want), 8))
    num = pl.cdiv(n_rows, tile)
    return tile, num


# ---------------------------------------------------------------------------
# Kernel 1: standard layout. Output block is (TB, dim). freqs / phase are
# resident (1, dim) inputs; one sin per element.
# ---------------------------------------------------------------------------
def _standard_kernel(t_ref, freqs_ref, phase_ref, o_ref):
    # t_ref: (TB, 1) f32 ; freqs/phase: (1, dim) f32 ; o_ref: (TB, dim)
    o_ref[...] = jnp.sin(t_ref[...] * freqs_ref[...] + phase_ref[...]).astype(o_ref.dtype)


# ---------------------------------------------------------------------------
# Kernel 2: lane-packed layout for dim < 128 with dim | 128.
# (B, dim) is presented row-major as (R, 128) with g = 128 // dim timesteps per
# output row, so stores are full-lane (no vst.msk). Each timestep is expanded
# across its dim-wide lane group with a one-hot matmul on the idle MXU.
# ---------------------------------------------------------------------------
def _lane_packed_kernel(t_ref, onehot_ref, freqs_ref, phase_ref, o_ref):
    # t_ref: (TR, g) f32 ; onehot: (g, 128) ; freqs/phase: (1, 128) ; o_ref: (TR, 128)
    t_exp = jnp.dot(t_ref[...], onehot_ref[...],
                    preferred_element_type=jnp.float32,
                    precision=jax.lax.Precision.HIGHEST)       # exact pass-through of f32 time
    o_ref[...] = jnp.sin(t_exp * freqs_ref[...] + phase_ref[...]).astype(o_ref.dtype)


# ---------------------------------------------------------------------------
# Wrapper
# ---------------------------------------------------------------------------
def sinusoidal_position_embeddings(time, dim, *, out_dtype=jnp.float32):
    """time: (B,) -> (B, dim); same semantics as the torch module."""
    assert dim % 2 == 0, "dim must be even"
    assert dim >= 4, "dim must be >= 4 (dim == 2 divides by zero in the torch module too)"

    B = time.shape[0]
    half_dim = dim // 2
    scale = math.log(10000.0) / (half_dim - 1)
    t = time.astype(jnp.float32)
    out_bytes = jnp.dtype(out_dtype).itemsize

    use_lane_packed = (dim < 128) and (128 % dim == 0)
    # TODO(synk): dims < 128 with 128 % dim != 0 (48, 80, 96, ...) still take the
    # standard path with sub-128-lane (masked) stores; an lcm(dim,128) row packing
    # would recover full-lane stores for those too.

    if use_lane_packed:
        # --- lane-dense packed output path --------------------------------
        g = 128 // dim                              # timesteps per packed output row
        r_needed = pl.cdiv(B, g)
        # per packed row: output 128*out_bytes, input (TR, g) lane-padded to 128*4, x2 buffers each
        per_row = 2 * 128 * out_bytes + 2 * 128 * 4
        row_cap = max(8, (_VMEM_BUDGET // per_row) // 8 * 8)
        TR, num_tiles = _choose_tiles(max(r_needed, 1), row_cap)
        R = TR * num_tiles
        B_pad = R * g

        t2d = jnp.pad(t, (0, B_pad - B)).reshape(R, g)      # row-major, layout-preserving

        lane = jnp.arange(128, dtype=jnp.int32)
        col = lane % dim
        freqs = jnp.exp(-scale * (col // 2).astype(jnp.float32)).reshape(1, 128)
        phase = ((col % 2).astype(jnp.float32) * _HALF_PI).reshape(1, 128)
        onehot = (lane[None, :] // dim ==
                  jnp.arange(g, dtype=jnp.int32)[:, None]).astype(jnp.float32)   # (g, 128)

        out_packed = pl.pallas_call(
            _lane_packed_kernel,
            out_shape=jax.ShapeDtypeStruct((R, 128), out_dtype),
            grid=(num_tiles,),
            in_specs=[pl.BlockSpec((TR, g), lambda i: (i, 0)),
                      pl.BlockSpec((g, 128), lambda i: (0, 0)),    # resident
                      pl.BlockSpec((1, 128), lambda i: (0, 0)),    # resident
                      pl.BlockSpec((1, 128), lambda i: (0, 0))],   # resident
            out_specs=pl.BlockSpec((TR, 128), lambda i: (i, 0)),
            compiler_params=pltpu.CompilerParams(
                dimension_semantics=("parallel",)),
            cost_estimate=pl.CostEstimate(
                flops=2 * B_pad * dim + 2 * R * g * 128,
                transcendentals=B_pad * dim,
                bytes_accessed=B_pad * 4 + B_pad * dim * out_bytes),
        )(t2d, onehot, freqs, phase)
        # row-major repack back to (B, dim); flat element order is identical.
        return out_packed.reshape(B_pad, dim)[:B]

    # --- standard path (dim >= 128, or dim does not divide 128) -----------
    # per row: output dim*out_bytes, input (TB, 1) lane-padded to 128*4, x2 buffers each
    per_row = 2 * dim * out_bytes + 2 * 128 * 4
    row_cap = max(8, (_VMEM_BUDGET // per_row) // 8 * 8)
    TB, num_tiles = _choose_tiles(max(B, 1), row_cap)
    B_pad = TB * num_tiles

    t2d = jnp.pad(t, (0, B_pad - B)).reshape(B_pad, 1)

    col = jnp.arange(dim, dtype=jnp.int32)
    freqs = jnp.exp(-scale * (col // 2).astype(jnp.float32)).reshape(1, dim)
    phase = ((col % 2).astype(jnp.float32) * _HALF_PI).reshape(1, dim)

    out = pl.pallas_call(
        _standard_kernel,
        out_shape=jax.ShapeDtypeStruct((B_pad, dim), out_dtype),
        grid=(num_tiles,),
        in_specs=[pl.BlockSpec((TB, 1), lambda i: (i, 0)),
                  pl.BlockSpec((1, dim), lambda i: (0, 0)),    # resident
                  pl.BlockSpec((1, dim), lambda i: (0, 0))],   # resident
        out_specs=pl.BlockSpec((TB, dim), lambda i: (i, 0)),
        compiler_params=pltpu.CompilerParams(
            dimension_semantics=("parallel",)),
        cost_estimate=pl.CostEstimate(
            flops=2 * B_pad * dim,
            transcendentals=B_pad * dim,
            bytes_accessed=B_pad * 4 + B_pad * dim * out_bytes),
    )(t2d, freqs, phase)
    return out[:B]


# ---------------------------------------------------------------------------
# Pure-JAX reference (mirrors the torch module)
# ---------------------------------------------------------------------------
def _reference(time, dim):
    half_dim = dim // 2
    emb = math.log(10000.0) / (half_dim - 1)
    emb = jnp.exp(jnp.arange(half_dim, dtype=jnp.float32) * -emb)
    emb = time[:, None] * emb[None, :]
    return jnp.stack((jnp.sin(emb), jnp.cos(emb)), axis=2).reshape(-1, dim)


if __name__ == "__main__":
    key = jax.random.PRNGKey(0)
    k1, k2 = jax.random.split(key)

    # Case 1: dim < 128 -> lane-packed output path (matches typical torch usage dim=32).
    B1, dim1 = 8, 32
    time1 = jax.random.uniform(k1, (B1,), dtype=jnp.float32) * 1000.0
    out1 = jax.block_until_ready(sinusoidal_position_embeddings(time1, dim1))
    ref1 = _reference(time1, dim1)
    assert out1.shape == (B1, dim1)
    # cos(x) = sin(x + pi/2) differs from native cos by a few ULPs of the large
    # (~1e3) argument -> slightly looser absolute tolerance.
    assert jnp.allclose(out1, ref1, atol=5e-4, rtol=0.0), float(jnp.max(jnp.abs(out1 - ref1)))

    # Case 2: dim multiple of 128 -> standard tiled path (exercises 2 grid steps).
    B2, dim2 = 16, 128
    time2 = jax.random.uniform(k2, (B2,), dtype=jnp.float32) * 1000.0
    out2 = jax.block_until_ready(sinusoidal_position_embeddings(time2, dim2))
    ref2 = _reference(time2, dim2)
    assert out2.shape == (B2, dim2)
    assert jnp.allclose(out2, ref2, atol=5e-4, rtol=0.0), float(jnp.max(jnp.abs(out2 - ref2)))

    print("KERNEL_OK")
</pallas_src>

<mosaic_0001>
module attributes {stable_mosaic.version = 11 : i64} {
  func.func @_lane_packed_kernel(%arg0: i32, %arg1: memref<8x4xf32, #tpu.memory_space<vmem>>, %arg2: memref<4x128xf32, #tpu.memory_space<vmem>>, %arg3: memref<1x128xf32, #tpu.memory_space<vmem>>, %arg4: memref<1x128xf32, #tpu.memory_space<vmem>>, %arg5: memref<8x128xf32, #tpu.memory_space<vmem>>) attributes {dimension_semantics = [#tpu.dimension_semantics<parallel>], iteration_bounds = array<i64: 1>, scalar_prefetch = 0 : i64, scratch_operands = 0 : i64, tpu.core_type = #tpu.core_type<tc>, window_params = [{transform_indices = @transform_0, window_bounds = array<i64: 8, 4>}, {pipeline_mode = #tpu.pipeline_mode<synchronous>, transform_indices = @transform_1, window_bounds = array<i64: 4, 128>}, {pipeline_mode = #tpu.pipeline_mode<synchronous>, transform_indices = @transform_2, window_bounds = array<i64: 1, 128>}, {pipeline_mode = #tpu.pipeline_mode<synchronous>, transform_indices = @transform_3, window_bounds = array<i64: 1, 128>}, {transform_indices = @transform_4, window_bounds = array<i64: 8, 128>}]} {
    %c0 = arith.constant 0 : index
    %c0_0 = arith.constant 0 : index
    %0 = vector.load %arg1[%c0, %c0_0] : memref<8x4xf32, #tpu.memory_space<vmem>>, vector<8x4xf32>
    %c0_1 = arith.constant 0 : index
    %c0_2 = arith.constant 0 : index
    %1 = vector.load %arg2[%c0_1, %c0_2] : memref<4x128xf32, #tpu.memory_space<vmem>>, vector<4x128xf32>
    %cst = arith.constant dense<0.000000e+00> : vector<8x128xf32>
    %2 = tpu.matmul %0, %1, %cst {dimension_numbers = #tpu.dot_dimension_numbers<[1], [0], [0], [1], [0, 0, 1, 1], [], []>, precision = #tpu.contract_precision<fp32>} : vector<8x4xf32>, vector<4x128xf32>, vector<8x128xf32> -> vector<8x128xf32>
    %c0_3 = arith.constant 0 : index
    %c0_4 = arith.constant 0 : index
    %3 = vector.load %arg3[%c0_3, %c0_4] : memref<1x128xf32, #tpu.memory_space<vmem>>, vector<1x128xf32>
    %4 = vector.broadcast %3 : vector<1x128xf32> to vector<8x128xf32>
    %5 = arith.mulf %2, %4 : vector<8x128xf32>
    %c0_5 = arith.constant 0 : index
    %c0_6 = arith.constant 0 : index
    %6 = vector.load %arg4[%c0_5, %c0_6] : memref<1x128xf32, #tpu.memory_space<vmem>>, vector<1x128xf32>
    %7 = vector.broadcast %6 : vector<1x128xf32> to vector<8x128xf32>
    %8 = arith.addf %5, %7 : vector<8x128xf32>
    %9 = math.sin %8 : vector<8x128xf32>
    %c0_7 = arith.constant 0 : index
    %c0_8 = arith.constant 0 : index
    %10 = vector.load %arg5[%c0_7, %c0_8] : memref<8x128xf32, #tpu.memory_space<vmem>>, vector<8x128xf32>
    tpu.vector_store %arg5[%c0_7, %c0_8], %9 {strides = array<i32>} : memref<8x128xf32, #tpu.memory_space<vmem>>, vector<8x128xf32>,
    return
  }
  func.func @transform_0(%arg0: i32) -> (i32, i32) {
    %c0_i32 = arith.constant 0 : i32
    %c0_i32_0 = arith.constant 0 : i32
    return %arg0, %c0_i32 : i32, i32
  }
  func.func @transform_1(%arg0: i32) -> (i32, i32) {
    %c0_i32 = arith.constant 0 : i32
    %c0_i32_0 = arith.constant 0 : i32
    %c0_i32_1 = arith.constant 0 : i32
    return %c0_i32, %c0_i32_0 : i32, i32
  }
  func.func @transform_2(%arg0: i32) -> (i32, i32) {
    %c0_i32 = arith.constant 0 : i32
    %c0_i32_0 = arith.constant 0 : i32
    %c0_i32_1 = arith.constant 0 : i32
    return %c0_i32, %c0_i32_0 : i32, i32
  }
  func.func @transform_3(%arg0: i32) -> (i32, i32) {
    %c0_i32 = arith.constant 0 : i32
    %c0_i32_0 = arith.constant 0 : i32
    %c0_i32_1 = arith.constant 0 : i32
    return %c0_i32, %c0_i32_0 : i32, i32
  }
  func.func @transform_4(%arg0: i32) -> (i32, i32) {
    %c0_i32 = arith.constant 0 : i32
    %c0_i32_0 = arith.constant 0 : i32
    return %arg0, %c0_i32 : i32, i32
  }
}

</mosaic_0001>

<llo_original>
// kernel: tpu_custom_call.1
$region0: #{tpu_custom_call.1}
  #allocation0 [shape = 'u32[]', space=smem, size = 0x4, offset = 0x4, fixed_abs, tag = 'smem constant byte address 0x4 - core index']
  #allocation1 [shape = 'u32[144,128]{1,0:T(1,128)}', space=vmem, size = 0x12000, scoped, tag = 'internal scratch']
  %s0 = inlined_call_operand.vmem [shape: f32[8,4], index: 0, kind: input, shape index: {}]
  %s1 = inlined_call_operand.vmem [shape: f32[4,128], index: 1, kind: input, shape index: {}]
  %s2 = inlined_call_operand.vmem [shape: f32[1,128], index: 2, kind: input, shape index: {}]
  %s3 = inlined_call_operand.vmem [shape: f32[1,128], index: 3, kind: input, shape index: {}]
  %s4 = inlined_call_operand.hbm [shape: f32[8,128], index: 4, kind: output, shape index: {}]
  %s5 = sld [smem:[#allocation0]]
  $region26: #{tpu_custom_call.1} parent=0
    _
  %s7 = ssub.s32 1, %s5
  %s8 = scalar_select 0, %s7, %s5
  $region1: #{tpu_custom_call.1} parent=0
    #allocation2 [shape = 'u8[4096]{0}', space=vmem, size = 0x1000, scoped, tag = 'output window, operand 0, single buffered']
    #allocation3 [shape = 's32[1]{0}', space=sflag, size = 0x4, scoped, tag = 'scoped memory for tpu_custom_call.1']
    %9 = vsyncpa [#allocation3], 0
    // Predicated region
    $region2: #{tpu_custom_call.1} parent=1 // pred_check
      _
    $region3: #{tpu_custom_call.1} parent=1 // pred_check_branch
      %11 = sbr.rel (0) target = $region5
    $region4: #{tpu_custom_call.1} parent=1 // pred_region
      _
    $region5: #{tpu_custom_call.1} parent=1 // pred_fallthru
      _
    // Predicated region
    $region6: #{tpu_custom_call.1} parent=1 // pred_check
      _
    $region7: #{tpu_custom_call.1} parent=1 // pred_check_branch
      %13 = sbr.rel (0) target = $region9
    $region8: #{tpu_custom_call.1} parent=1 // pred_region
      _
    $region9: #{tpu_custom_call.1} parent=1 // pred_fallthru
      _
    // Predicated region
    $region10: #{tpu_custom_call.1} parent=1 // pred_check
      _
    $region11: #{tpu_custom_call.1} parent=1 // pred_check_branch
      %15 = sbr.rel (0) target = $region13
    $region12: #{tpu_custom_call.1} parent=1 // pred_region
      _
    $region13: #{tpu_custom_call.1} parent=1 // pred_fallthru
      _
    // Predicated region
    $region14: #{tpu_custom_call.1} parent=1 // pred_check
      _
    $region15: #{tpu_custom_call.1} parent=1 // pred_check_branch
      %17 = sbr.rel (0) target = $region17
    $region16: #{tpu_custom_call.1} parent=1 // pred_region
      _
    $region17: #{tpu_custom_call.1} parent=1 // pred_fallthru
      _
    %v18 = vld [vmem:[%s0] sm:$0xff]
    %v19 = vld [vmem:[%s1] sm:$0xf]
    %vm20 = vcmask 31744
    %v22 = vsel %vm20, %v18, 0
    %vm24 = vcmask 1043456
    %v26 = vsel %vm24, %v19, 0
    %28 = vmatprep.subr.mxu0 0.0
    %29 = vmatpush1.msra.mxu0 0.0
    %30 = vmatprep.subr.mxu0 0.0
    %31 = vmatpush1.msra.mxu0 0.0
    %32 = vmatprep.subr.mxu0 0.0
    %33 = vmatpush1.msra.mxu0 0.0
    %34 = vmatprep.subr.mxu0 0.0
    %35 = vmatpush1.msra.mxu0 0.0
    %36 = vmatprep.subr.mxu0 0.0
    %37 = vmatpush1.msra.mxu0 0.0
    %38 = vmatprep.subr.mxu0 0.0
    %39 = vmatpush1.msra.mxu0 0.0
    %40 = vmatprep.subr.mxu0 0.0
    %41 = vmatpush1.msra.mxu0 0.0
    %42 = vmatprep.subr.mxu0 0.0
    %43 = vmatpush1.msra.mxu0 0.0
    %44 = vmatprep.subr.mxu0 0.0
    %45 = vmatpush1.msra.mxu0 0.0
    %46 = vmatprep.subr.mxu0 0.0
    %47 = vmatpush1.msra.mxu0 0.0
    %48 = vmatprep.subr.mxu0 0.0
    %49 = vmatpush1.msra.mxu0 0.0
    %50 = vmatprep.subr.mxu0 0.0
    %51 = vmatpush1.msra.mxu0 0.0
    %52 = vmatprep.subr.mxu0 0.0
    %53 = vmatpush1.msra.mxu0 0.0
    %54 = vmatprep.subr.mxu0 0.0
    %55 = vmatpush1.msra.mxu0 0.0
    %56 = vmatprep.subr.mxu0 0.0
    %57 = vmatpush1.msra.mxu0 0.0
    %58 = vmatprep.subr.mxu0 0.0
    %v59 = vand.u32 %v26, 4294901760
    %60 = vmatpush1.msra.mxu0 %v59
    %61 = vmatprep.subr.mxu0 0.0
    %62 = vmatpush2.msra.mxu0 0.0
    %63 = vmatprep.subr.mxu0 0.0
    %64 = vmatpush2.msra.mxu0 0.0
    %65 = vmatprep.subr.mxu0 0.0
    %66 = vmatpush2.msra.mxu0 0.0
    %67 = vmatprep.subr.mxu0 0.0
    %68 = vmatpush2.msra.mxu0 0.0
    %69 = vmatprep.subr.mxu0 0.0
    %70 = vmatpush2.msra.mxu0 0.0
    %71 = vmatprep.subr.mxu0 0.0
    %72 = vmatpush2.msra.mxu0 0.0
    %73 = vmatprep.subr.mxu0 0.0
    %74 = vmatpush2.msra.mxu0 0.0
    %75 = vmatprep.subr.mxu0 0.0
    %76 = vmatpush2.msra.mxu0 0.0
    %77 = vmatprep.subr.mxu0 0.0
    %78 = vmatpush2.msra.mxu0 0.0
    %79 = vmatprep.subr.mxu0 0.0
    %80 = vmatpush2.msra.mxu0 0.0
    %81 = vmatprep.subr.mxu0 0.0
    %82 = vmatpush2.msra.mxu0 0.0
    %83 = vmatprep.subr.mxu0 0.0
    %84 = vmatpush2.msra.mxu0 0.0
    %85 = vmatprep.subr.mxu0 0.0
    %86 = vmatpush2.msra.mxu0 0.0
    %87 = vmatprep.subr.mxu0 0.0
    %88 = vmatpush2.msra.mxu0 0.0
    %89 = vmatprep.subr.mxu0 0.0
    %90 = vmatpush2.msra.mxu0 0.0
    %91 = vmatprep.subr.mxu0 0.0
    %92 = vmatpush2.msra.mxu0 0.0
    %93 = vmatprep.mubr.f32.mxu0 0.0
    %v94 = vand.u32 %v22, 4294901760
    %v95 = vsub.f32 %v22, %v94
    %v96 = vand.u32 %v95, 4294901760
    %v97 = vsub.f32 %v95, %v96
    %v98 = vand.u32 %v97, 4294901760
    %99 = vmatmul.mubr.f32.gmra.mxu0 %v98
    %v100 = vpop.f32.mrf.mxu0
    %v101 = vadd.f32 0.0, %v100
    %v102 = vpop.f32.mrf.mxu0
    %103 = vdwg.mxu0
    %104 = vmatprep.subr.mxu0 0.0
    %105 = vmatpush1.msra.mxu0 0.0
    %106 = vmatprep.subr.mxu0 0.0
    %107 = vmatpush1.msra.mxu0 0.0
    %108 = vmatprep.subr.mxu0 0.0
    %109 = vmatpush1.msra.mxu0 0.0
    %110 = vmatprep.subr.mxu0 0.0
    %111 = vmatpush1.msra.mxu0 0.0
    %112 = vmatprep.subr.mxu0 0.0
    %113 = vmatpush1.msra.mxu0 0.0
    %114 = vmatprep.subr.mxu0 0.0
    %115 = vmatpush1.msra.mxu0 0.0
    %116 = vmatprep.subr.mxu0 0.0
    %117 = vmatpush1.msra.mxu0 0.0
    %118 = vmatprep.subr.mxu0 0.0
    %119 = vmatpush1.msra.mxu0 0.0
    %120 = vmatprep.subr.mxu0 0.0
    %121 = vmatpush1.msra.mxu0 0.0
    %122 = vmatprep.subr.mxu0 0.0
    %123 = vmatpush1.msra.mxu0 0.0
    %124 = vmatprep.subr.mxu0 0.0
    %125 = vmatpush1.msra.mxu0 0.0
    %126 = vmatprep.subr.mxu0 0.0
    %127 = vmatpush1.msra.mxu0 0.0
    %128 = vmatprep.subr.mxu0 0.0
    %129 = vmatpush1.msra.mxu0 0.0
    %130 = vmatprep.subr.mxu0 0.0
    %131 = vmatpush1.msra.mxu0 0.0
    %132 = vmatprep.subr.mxu0 0.0
    %133 = vmatpush1.msra.mxu0 0.0
    %134 = vmatprep.subr.mxu0 0.0
    %v135 = vand.u32 %v26, 4294901760
    %v136 = vsub.f32 %v26, %v135
    %v137 = vand.u32 %v136, 4294901760
    %v138 = vsub.f32 %v136, %v137
    %v139 = vand.u32 %v138, 4294901760
    %140 = vmatpush1.msra.mxu0 %v139
    %141 = vmatprep.subr.mxu0 0.0
    %142 = vmatpush2.msra.mxu0 0.0
    %143 = vmatprep.subr.mxu0 0.0
    %144 = vmatpush2.msra.mxu0 0.0
    %145 = vmatprep.subr.mxu0 0.0
    %146 = vmatpush2.msra.mxu0 0.0
    %147 = vmatprep.subr.mxu0 0.0
    %148 = vmatpush2.msra.mxu0 0.0
    %149 = vmatprep.subr.mxu0 0.0
    %150 = vmatpush2.msra.mxu0 0.0
    %151 = vmatprep.subr.mxu0 0.0
    %152 = vmatpush2.msra.mxu0 0.0
    %153 = vmatprep.subr.mxu0 0.0
    %154 = vmatpush2.msra.mxu0 0.0
    %155 = vmatprep.subr.mxu0 0.0
    %156 = vmatpush2.msra.mxu0 0.0
    %157 = vmatprep.subr.mxu0 0.0
    %158 = vmatpush2.msra.mxu0 0.0
    %159 = vmatprep.subr.mxu0 0.0
    %160 = vmatpush2.msra.mxu0 0.0
    %161 = vmatprep.subr.mxu0 0.0
    %162 = vmatpush2.msra.mxu0 0.0
    %163 = vmatprep.subr.mxu0 0.0
    %164 = vmatpush2.msra.mxu0 0.0
    %165 = vmatprep.subr.mxu0 0.0
    %166 = vmatpush2.msra.mxu0 0.0
    %167 = vmatprep.subr.mxu0 0.0
    %168 = vmatpush2.msra.mxu0 0.0
    %169 = vmatprep.subr.mxu0 0.0
    %170 = vmatpush2.msra.mxu0 0.0
    %171 = vmatprep.subr.mxu0 0.0
    %172 = vmatpush2.msra.mxu0 0.0
    %173 = vmatprep.mubr.f32.mxu0 0.0
    %v174 = vand.u32 %v22, 4294901760
    %175 = vmatmul.mubr.f32.gmra.mxu0 %v174
    %v176 = vpop.f32.mrf.mxu0
    %v177 = vadd.f32 %v101, %v176
    %v178 = vpop.f32.mrf.mxu0
    %179 = vdwg.mxu0
    %180 = vmatprep.subr.mxu0 0.0
    %181 = vmatpush1.msra.mxu0 0.0
    %182 = vmatprep.subr.mxu0 0.0
    %183 = vmatpush1.msra.mxu0 0.0
    %184 = vmatprep.subr.mxu0 0.0
    %185 = vmatpush1.msra.mxu0 0.0
    %186 = vmatprep.subr.mxu0 0.0
    %187 = vmatpush1.msra.mxu0 0.0
    %188 = vmatprep.subr.mxu0 0.0
    %189 = vmatpush1.msra.mxu0 0.0
    %190 = vmatprep.subr.mxu0 0.0
    %191 = vmatpush1.msra.mxu0 0.0
    %192 = vmatprep.subr.mxu0 0.0
    %193 = vmatpush1.msra.mxu0 0.0
    %194 = vmatprep.subr.mxu0 0.0
    %195 = vmatpush1.msra.mxu0 0.0
    %196 = vmatprep.subr.mxu0 0.0
    %197 = vmatpush1.msra.mxu0 0.0
    %198 = vmatprep.subr.mxu0 0.0
    %199 = vmatpush1.msra.mxu0 0.0
    %200 = vmatprep.subr.mxu0 0.0
    %201 = vmatpush1.msra.mxu0 0.0
    %202 = vmatprep.subr.mxu0 0.0
    %203 = vmatpush1.msra.mxu0 0.0
    %204 = vmatprep.subr.mxu0 0.0
    %205 = vmatpush1.msra.mxu0 0.0
    %206 = vmatprep.subr.mxu0 0.0
    %207 = vmatpush1.msra.mxu0 0.0
    %208 = vmatprep.subr.mxu0 0.0
    %209 = vmatpush1.msra.mxu0 0.0
    %210 = vmatprep.subr.mxu0 0.0
    %v211 = vand.u32 %v26, 4294901760
    %v212 = vsub.f32 %v26, %v211
    %213 = vmatpush1.msra.mxu0 %v212
    %214 = vmatprep.subr.mxu0 0.0
    %215 = vmatpush2.msra.mxu0 0.0
    %216 = vmatprep.subr.mxu0 0.0
    %217 = vmatpush2.msra.mxu0 0.0
    %218 = vmatprep.subr.mxu0 0.0
    %219 = vmatpush2.msra.mxu0 0.0
    %220 = vmatprep.subr.mxu0 0.0
    %221 = vmatpush2.msra.mxu0 0.0
    %222 = vmatprep.subr.mxu0 0.0
    %223 = vmatpush2.msra.mxu0 0.0
    %224 = vmatprep.subr.mxu0 0.0
    %225 = vmatpush2.msra.mxu0 0.0
    %226 = vmatprep.subr.mxu0 0.0
    %227 = vmatpush2.msra.mxu0 0.0
    %228 = vmatprep.subr.mxu0 0.0
    %229 = vmatpush2.msra.mxu0 0.0
    %230 = vmatprep.subr.mxu0 0.0
    %231 = vmatpush2.msra.mxu0 0.0
    %232 = vmatprep.subr.mxu0 0.0
    %233 = vmatpush2.msra.mxu0 0.0
    %234 = vmatprep.subr.mxu0 0.0
    %235 = vmatpush2.msra.mxu0 0.0
    %236 = vmatprep.subr.mxu0 0.0
    %237 = vmatpush2.msra.mxu0 0.0
    %238 = vmatprep.subr.mxu0 0.0
    %239 = vmatpush2.msra.mxu0 0.0
    %240 = vmatprep.subr.mxu0 0.0
    %241 = vmatpush2.msra.mxu0 0.0
    %242 = vmatprep.subr.mxu0 0.0
    %243 = vmatpush2.msra.mxu0 0.0
    %244 = vmatprep.subr.mxu0 0.0
    %245 = vmatpush2.msra.mxu0 0.0
    %246 = vmatprep.mubr.f32.mxu0 0.0
    %v247 = vand.u32 %v22, 4294901760
    %v248 = vsub.f32 %v22, %v247
    %249 = vmatmul.mubr.f32.gmra.mxu0 %v248
    %v250 = vpop.f32.mrf.mxu0
    %v251 = vadd.f32 %v177, %v250
    %v252 = vpop.f32.mrf.mxu0
    %253 = vdwg.mxu0
    %254 = vmatprep.subr.mxu0 0.0
    %255 = vmatpush1.msra.mxu0 0.0
    %256 = vmatprep.subr.mxu0 0.0
    %257 = vmatpush1.msra.mxu0 0.0
    %258 = vmatprep.subr.mxu0 0.0
    %259 = vmatpush1.msra.mxu0 0.0
    %260 = vmatprep.subr.mxu0 0.0
    %261 = vmatpush1.msra.mxu0 0.0
    %262 = vmatprep.subr.mxu0 0.0
    %263 = vmatpush1.msra.mxu0 0.0
    %264 = vmatprep.subr.mxu0 0.0
    %265 = vmatpush1.msra.mxu0 0.0
    %266 = vmatprep.subr.mxu0 0.0
    %267 = vmatpush1.msra.mxu0 0.0
    %268 = vmatprep.subr.mxu0 0.0
    %269 = vmatpush1.msra.mxu0 0.0
    %270 = vmatprep.subr.mxu0 0.0
    %271 = vmatpush1.msra.mxu0 0.0
    %272 = vmatprep.subr.mxu0 0.0
    %273 = vmatpush1.msra.mxu0 0.0
    %274 = vmatprep.subr.mxu0 0.0
    %275 = vmatpush1.msra.mxu0 0.0
    %276 = vmatprep.subr.mxu0 0.0
    %277 = vmatpush1.msra.mxu0 0.0
    %278 = vmatprep.subr.mxu0 0.0
    %279 = vmatpush1.msra.mxu0 0.0
    %280 = vmatprep.subr.mxu0 0.0
    %281 = vmatpush1.msra.mxu0 0.0
    %282 = vmatprep.subr.mxu0 0.0
    %283 = vmatpush1.msra.mxu0 0.0
    %284 = vmatprep.subr.mxu0 0.0
    %v285 = vand.u32 %v26, 4294901760
    %286 = vmatpush1.msra.mxu0 %v285
    %287 = vmatprep.subr.mxu0 0.0
    %288 = vmatpush2.msra.mxu0 0.0
    %289 = vmatprep.subr.mxu0 0.0
    %290 = vmatpush2.msra.mxu0 0.0
    %291 = vmatprep.subr.mxu0 0.0
    %292 = vmatpush2.msra.mxu0 0.0
    %293 = vmatprep.subr.mxu0 0.0
    %294 = vmatpush2.msra.mxu0 0.0
    %295 = vmatprep.subr.mxu0 0.0
    %296 = vmatpush2.msra.mxu0 0.0
    %297 = vmatprep.subr.mxu0 0.0
    %298 = vmatpush2.msra.mxu0 0.0
    %299 = vmatprep.subr.mxu0 0.0
    %300 = vmatpush2.msra.mxu0 0.0
    %301 = vmatprep.subr.mxu0 0.0
    %302 = vmatpush2.msra.mxu0 0.0
    %303 = vmatprep.subr.mxu0 0.0
    %304 = vmatpush2.msra.mxu0 0.0
    %305 = vmatprep.subr.mxu0 0.0
    %306 = vmatpush2.msra.mxu0 0.0
    %307 = vmatprep.subr.mxu0 0.0
    %308 = vmatpush2.msra.mxu0 0.0
    %309 = vmatprep.subr.mxu0 0.0
    %310 = vmatpush2.msra.mxu0 0.0
    %311 = vmatprep.subr.mxu0 0.0
    %312 = vmatpush2.msra.mxu0 0.0
    %313 = vmatprep.subr.mxu0 0.0
    %314 = vmatpush2.msra.mxu0 0.0
    %315 = vmatprep.subr.mxu0 0.0
    %316 = vmatpush2.msra.mxu0 0.0
    %317 = vmatprep.subr.mxu0 0.0
    %318 = vmatpush2.msra.mxu0 0.0
    %319 = vmatprep.mubr.f32.mxu0 0.0
    %v320 = vand.u32 %v22, 4294901760
    %v321 = vsub.f32 %v22, %v320
    %v322 = vand.u32 %v321, 4294901760
    %323 = vmatmul.mubr.f32.gmra.mxu0 %v322
    %v324 = vpop.f32.mrf.mxu0
    %v325 = vadd.f32 %v251, %v324
    %v326 = vpop.f32.mrf.mxu0
    %327 = vdwg.mxu0
    %328 = vmatprep.subr.mxu0 0.0
    %329 = vmatpush1.msra.mxu0 0.0
    %330 = vmatprep.subr.mxu0 0.0
    %331 = vmatpush1.msra.mxu0 0.0
    %332 = vmatprep.subr.mxu0 0.0
    %333 = vmatpush1.msra.mxu0 0.0
    %334 = vmatprep.subr.mxu0 0.0
    %335 = vmatpush1.msra.mxu0 0.0
    %336 = vmatprep.subr.mxu0 0.0
    %337 = vmatpush1.msra.mxu0 0.0
    %338 = vmatprep.subr.mxu0 0.0
    %339 = vmatpush1.msra.mxu0 0.0
    %340 = vmatprep.subr.mxu0 0.0
    %341 = vmatpush1.msra.mxu0 0.0
    %342 = vmatprep.subr.mxu0 0.0
    %343 = vmatpush1.msra.mxu0 0.0
    %344 = vmatprep.subr.mxu0 0.0
    %345 = vmatpush1.msra.mxu0 0.0
    %346 = vmatprep.subr.mxu0 0.0
    %347 = vmatpush1.msra.mxu0 0.0
    %348 = vmatprep.subr.mxu0 0.0
    %349 = vmatpush1.msra.mxu0 0.0
    %350 = vmatprep.subr.mxu0 0.0
    %351 = vmatpush1.msra.mxu0 0.0
    %352 = vmatprep.subr.mxu0 0.0
    %353 = vmatpush1.msra.mxu0 0.0
    %354 = vmatprep.subr.mxu0 0.0
    %355 = vmatpush1.msra.mxu0 0.0
    %356 = vmatprep.subr.mxu0 0.0
    %357 = vmatpush1.msra.mxu0 0.0
    %358 = vmatprep.subr.mxu0 0.0
    %v359 = vand.u32 %v26, 4294901760
    %v360 = vsub.f32 %v26, %v359
    %v361 = vand.u32 %v360, 4294901760
    %362 = vmatpush1.msra.mxu0 %v361
    %363 = vmatprep.subr.mxu0 0.0
    %364 = vmatpush2.msra.mxu0 0.0
    %365 = vmatprep.subr.mxu0 0.0
    %366 = vmatpush2.msra.mxu0 0.0
    %367 = vmatprep.subr.mxu0 0.0
    %368 = vmatpush2.msra.mxu0 0.0
    %369 = vmatprep.subr.mxu0 0.0
    %370 = vmatpush2.msra.mxu0 0.0
    %371 = vmatprep.subr.mxu0 0.0
    %372 = vmatpush2.msra.mxu0 0.0
    %373 = vmatprep.subr.mxu0 0.0
    %374 = vmatpush2.msra.mxu0 0.0
    %375 = vmatprep.subr.mxu0 0.0
    %376 = vmatpush2.msra.mxu0 0.0
    %377 = vmatprep.subr.mxu0 0.0
    %378 = vmatpush2.msra.mxu0 0.0
    %379 = vmatprep.subr.mxu0 0.0
    %380 = vmatpush2.msra.mxu0 0.0
    %381 = vmatprep.subr.mxu0 0.0
    %382 = vmatpush2.msra.mxu0 0.0
    %383 = vmatprep.subr.mxu0 0.0
    %384 = vmatpush2.msra.mxu0 0.0
    %385 = vmatprep.subr.mxu0 0.0
    %386 = vmatpush2.msra.mxu0 0.0
    %387 = vmatprep.subr.mxu0 0.0
    %388 = vmatpush2.msra.mxu0 0.0
    %389 = vmatprep.subr.mxu0 0.0
    %390 = vmatpush2.msra.mxu0 0.0
    %391 = vmatprep.subr.mxu0 0.0
    %392 = vmatpush2.msra.mxu0 0.0
    %393 = vmatprep.subr.mxu0 0.0
    %394 = vmatpush2.msra.mxu0 0.0
    %395 = vmatprep.mubr.f32.mxu0 0.0
    %v396 = vand.u32 %v22, 4294901760
    %397 = vmatmul.mubr.f32.gmra.mxu0 %v396
    %v398 = vpop.f32.mrf.mxu0
    %v399 = vadd.f32 %v325, %v398
    %v400 = vpop.f32.mrf.mxu0
    %401 = vdwg.mxu0
    %402 = vmatprep.subr.mxu0 0.0
    %403 = vmatpush1.msra.mxu0 0.0
    %404 = vmatprep.subr.mxu0 0.0
    %405 = vmatpush1.msra.mxu0 0.0
    %406 = vmatprep.subr.mxu0 0.0
    %407 = vmatpush1.msra.mxu0 0.0
    %408 = vmatprep.subr.mxu0 0.0
    %409 = vmatpush1.msra.mxu0 0.0
    %410 = vmatprep.subr.mxu0 0.0
    %411 = vmatpush1.msra.mxu0 0.0
    %412 = vmatprep.subr.mxu0 0.0
    %413 = vmatpush1.msra.mxu0 0.0
    %414 = vmatprep.subr.mxu0 0.0
    %415 = vmatpush1.msra.mxu0 0.0
    %416 = vmatprep.subr.mxu0 0.0
    %417 = vmatpush1.msra.mxu0 0.0
    %418 = vmatprep.subr.mxu0 0.0
    %419 = vmatpush1.msra.mxu0 0.0
    %420 = vmatprep.subr.mxu0 0.0
    %421 = vmatpush1.msra.mxu0 0.0
    %422 = vmatprep.subr.mxu0 0.0
    %423 = vmatpush1.msra.mxu0 0.0
    %424 = vmatprep.subr.mxu0 0.0
    %425 = vmatpush1.msra.mxu0 0.0
    %426 = vmatprep.subr.mxu0 0.0
    %427 = vmatpush1.msra.mxu0 0.0
    %428 = vmatprep.subr.mxu0 0.0
    %429 = vmatpush1.msra.mxu0 0.0
    %430 = vmatprep.subr.mxu0 0.0
    %431 = vmatpush1.msra.mxu0 0.0
    %432 = vmatprep.subr.mxu0 0.0
    %v433 = vand.u32 %v26, 4294901760
    %434 = vmatpush1.msra.mxu0 %v433
    %435 = vmatprep.subr.mxu0 0.0
    %436 = vmatpush2.msra.mxu0 0.0
    %437 = vmatprep.subr.mxu0 0.0
    %438 = vmatpush2.msra.mxu0 0.0
    %439 = vmatprep.subr.mxu0 0.0
    %440 = vmatpush2.msra.mxu0 0.0
    %441 = vmatprep.subr.mxu0 0.0
    %442 = vmatpush2.msra.mxu0 0.0
    %443 = vmatprep.subr.mxu0 0.0
    %444 = vmatpush2.msra.mxu0 0.0
    %445 = vmatprep.subr.mxu0 0.0
    %446 = vmatpush2.msra.mxu0 0.0
    %447 = vmatprep.subr.mxu0 0.0
    %448 = vmatpush2.msra.mxu0 0.0
    %449 = vmatprep.subr.mxu0 0.0
    %450 = vmatpush2.msra.mxu0 0.0
    %451 = vmatprep.subr.mxu0 0.0
    %452 = vmatpush2.msra.mxu0 0.0
    %453 = vmatprep.subr.mxu0 0.0
    %454 = vmatpush2.msra.mxu0 0.0
    %455 = vmatprep.subr.mxu0 0.0
    %456 = vmatpush2.msra.mxu0 0.0
    %457 = vmatprep.subr.mxu0 0.0
    %458 = vmatpush2.msra.mxu0 0.0
    %459 = vmatprep.subr.mxu0 0.0
    %460 = vmatpush2.msra.mxu0 0.0
    %461 = vmatprep.subr.mxu0 0.0
    %462 = vmatpush2.msra.mxu0 0.0
    %463 = vmatprep.subr.mxu0 0.0
    %464 = vmatpush2.msra.mxu0 0.0
    %465 = vmatprep.subr.mxu0 0.0
    %466 = vmatpush2.msra.mxu0 0.0
    %467 = vmatprep.mubr.f32.mxu0 0.0
    %v468 = vand.u32 %v22, 4294901760
    %469 = vmatmul.mubr.f32.gmra.mxu0 %v468
    %v470 = vpop.f32.mrf.mxu0
    %v471 = vadd.f32 %v399, %v470
    %v472 = vpop.f32.mrf.mxu0
    %473 = vdwg.mxu0
    %v474 = vld [vmem:[%s2] sm:$0x1]
    %v476 = vlaneseq
    %v477 = vshrl.u32 %v476, 7
    %v478 = vsub.s32 0, %v477
    %v479 = vrot.slane %v474, %v478
    %v481 = vmul.f32 %v471, %v479
    %v482 = vld [vmem:[%s3] sm:$0x1]
    %v484 = vlaneseq
    %v485 = vshrl.u32 %v484, 7
    %v486 = vsub.s32 0, %v485
    %v487 = vrot.slane %v482, %v486
    %v489 = vadd.f32 %v481, %v487
    %v490 = vand.u32 2147483647, %v489
    %vm491 = vcmp.le.f32.partialorder %v490, 0.7853982
    %vm492 = vcmp.lt.s32.totalorder %v489, 0
    %v493 = vand.u32 %v489, 2139095040
    %v494 = vshrl.u32 %v493, 23
    %v495 = vsub.s32 %v494, 127
    %v496 = vand.u32 2147483647, %v489
    %v497 = vand.u32 %v496, 8388607
    %v498 = vor.u32 %v497, 8388608
    %v499 = vsub.s32 0, %v498
    %v500 = vadd.s32 %v495, 1
    %vm501 = vcmp.gt.s32.totalorder %v500, 0
    %v502 = vsel %vm501, %v500, 0
    %v503 = vshrl.u32 %v502, 5
    %v504 = vand.u32 %v502, 31
    %v505 = vsub.s32 32, %v504
    %v506 = vshrl.u32 683565275, %v505
    %v507 = vshll.u32 683565275, %v504
    %v508 = vshrl.u32 2475754826, %v505
    %v509 = vor.u32 %v507, %v508
    %v510 = vshll.u32 2475754826, %v504
    %v511 = vshrl.u32 2131351028, %v505
    %v512 = vor.u32 %v510, %v511
    %v513 = vshll.u32 2131351028, %v504
    %v514 = vshrl.u32 2102212464, %v505
    %v515 = vor.u32 %v513, %v514
    %v516 = vshll.u32 2102212464, %v504
    %v517 = vshrl.u32 920167782, %v505
    %v518 = vor.u32 %v516, %v517
    %v519 = vshll.u32 920167782, %v504
    %v520 = vshrl.u32 1326507024, %v505
    %v521 = vor.u32 %v519, %v520
    %vm522 = vcmp.lt.s32.totalorder %v503, 1
    %vm523 = vcmp.lt.s32.totalorder %v503, 2
    %vm524 = vcmp.lt.s32.totalorder %v503, 3
    %vm525 = vcmp.lt.s32.totalorder %v503, 4
    %v526 = vsel %vm522, %v506, %v509
    %v527 = vsel %vm525, %v515, 2102212464
    %v528 = vsel %vm524, %v512, %v527
    %v529 = vsel %vm523, %v526, %v528
    %v530 = vsel %vm522, %v509, %v512
    %v531 = vsel %vm525, %v518, 920167782
    %v532 = vsel %vm524, %v515, %v531
    %v533 = vsel %vm523, %v530, %v532
    %v534 = vsel %vm522, %v512, %v515
    %v535 = vsel %vm525, %v521, 1326507024
    %v536 = vsel %vm524, %v518, %v535
    %v537 = vsel %vm523, %v534, %v536
    %v538 = vshll.u32 %v498, 8
    %v539 = vmul.u32.u64.compose %v538, %v537
    %v540 = vextract.low.u32 %v539
    %v541 = vextract.high.u32 %v539
    %v542 = vmul.u32.u64.compose %v538, %v533
    %v543 = vextract.low.u32 %v542
    %v544 = vextract.high.u32 %v542
    %v545 = vmul.u32 %v538, %v529
    %v546 = vadd.s32 %v541, %v543
    %vm547 = vc.u32 %v541, %v543
    %v548 = vadd.s32 %v544, 1
    %v549 = vsel %vm547, %v548, %v544
    %v550 = vadd.s32 %v545, %v549
    %v551 = vadd.s32 %v550, 536870912
    %v552 = vshrl.u32 %v551, 30
    %v553 = vshll.u32 %v552, 30
    %v554 = vsub.s32 %v550, %v553
    %vm555 = vcmp.lt.s32.totalorder %v554, 0
    %v556 = vsub.s32 0, %v554
    %v557 = vsel %vm555, %v556, %v554
    %v558 = vclz %v557
    %v559 = vsub.s32 %v558, 2
    %vm560 = vcmp.gt.s32.totalorder 0, %v559
    %v561 = vsel %vm560, 0, %v559
    %v562 = vsub.s32 32, %v561
    %v563 = vshll.u32 %v554, %v561
    %v564 = vshrl.u32 %v546, %v562
    %v565 = vor.u32 %v563, %v564
    %v566 = vsub.s32 4294967266, %v561
    %v567 = vadd.s32 %v566, 127
    %v568 = vshll.u32 %v567, 23
    %v569 = vor.u32 4788187, %v568
    %v570 = vand.u32 2147483647, %v569
    %v572 = vcvt.s32.f32 %v565
    %v573 = vmul.f32 %v572, %v570
    %v574 = vxor.u32 %v573, 2147483648
    %v575 = vsel %vm492, %v574, %v573
    %v576 = vsub.s32 4, %v552
    %v577 = vsel %vm492, %v576, %v552
    %v578 = vsel %vm491, %v489, %v575
    %v579 = vsel %vm491, 0, %v577
    %v580 = vcosq.f32.pop %v578
    %v581 = vsinq.f32.pop %v578
    %vm582 = vweird.f32 %v489
    %v583 = vadd.s32 %v579, 3
    %v584 = vand.u32 %v583, 3
    %vm585 = vcmp.lt.s32.totalorder %v584, 2
    %vm586 = vcmp.eq.s32.totalorder %v584, 0
    %v587 = vxor.u32 %v581, 2147483648
    %v588 = vsel %vm586, %v580, %v587
    %vm589 = vcmp.eq.s32.totalorder %v584, 2
    %v590 = vxor.u32 %v580, 2147483648
    %v591 = vsel %vm589, %v590, %v581
    %v592 = vsel %vm585, %v588, %v591
    %v593 = vsel %vm582, nan, %v592
    %594 = vst [vmem:[#allocation2] sm:$0xff] %v593
    // Predicated region
    $region18: #{tpu_custom_call.1} parent=1 // pred_check
      _
    $region19: #{tpu_custom_call.1} parent=1 // pred_check_branch
      %596 = sbr.rel (0) target = $region21
    $region20: #{tpu_custom_call.1} parent=1 // pred_region
      %s598 = ssub.s32 128, 128
      %599 = vsyncadd [#allocation3], %s598
      %s601 = sshll.u32 [#allocation2], 4
      %s602 = int_to_ptr.vmem [resolvable:$true] %s601
      %604 = dma.vmem_to_hbm [thread:$0]  %s602, 128, %s4, [#allocation3]
    $region21: #{tpu_custom_call.1} parent=1 // pred_fallthru
      _
    // Predicated region
    $region22: #{tpu_custom_call.1} parent=1 // pred_check
      _
    $region23: #{tpu_custom_call.1} parent=1 // pred_check_branch
      %606 = sbr.rel (0) target = $region25
    $region24: #{tpu_custom_call.1} parent=1 // pred_region
      %607 = dma.done [#allocation3], 128
    $region25: #{tpu_custom_call.1} parent=1 // pred_fallthru
      _
    %608 = vsyncpa [#allocation3], 1

</llo_original>
